<compile_context>
chip_gen: v6e
topology: v6e:2x2x1
jax: 0.10.0
libtpu: 0.0.40
codegen_flags: <defaults>
</compile_context>

<pallas_src>
import functools

import jax
import jax.numpy as jnp
from jax.experimental import pallas as pl
from jax.experimental.pallas import tpu as pltpu

_EPS = 1e-5


def _deconv_bn_relu_kernel(x_ref, w_ref, scale_ref, shift_ref, o_ref):
    # x_ref     : (tile, P*Cin)  bf16  packed input pixels
    # w_ref     : (P*Cin, L)     bf16  block-diagonal fused tap weights, L = P*4*Cout
    # scale_ref : (1, L)         f32   folded BN scale  (gamma * rsqrt(var+eps))
    # shift_ref : (1, L)         f32   folded BN shift  (beta - mean*scale)
    # o_ref     : (tile, L)      bf16  normalized + ReLU'd output (lane-dense store)
    y = jnp.dot(x_ref[...], w_ref[...], preferred_element_type=jnp.float32)
    o_ref[...] = jnp.maximum(y * scale_ref[...] + shift_ref[...], 0.0).astype(o_ref.dtype)


def _cdiv(a, b):
    return -(-a // b)


def _round_up(a, b):
    return _cdiv(a, b) * b


def _pick_pack(lanes_tap, cin, *, max_k=512):
    """Smallest pixel-packing factor P such that L = P*lanes_tap is a multiple
    of 128 lanes (unmasked vst) and, if affordable, >= 256 lanes (fills a full
    v6e/v7x 256-wide MXU output pass), keeping the contraction dim P*cin modest.
    Falls back to P=1 (correct, possibly masked stores) if nothing fits."""
    if lanes_tap % 128 == 0:
        return 2 if (lanes_tap < 256 and 2 * cin <= max_k) else 1
    best, P = 1, 1
    while P * cin <= max_k:
        L = P * lanes_tap
        if L % 128 == 0:
            best = P
            if L >= 256:
                break
        P += 1
    return best


def deconv2d_bn_relu(x, weight, bias, gamma, beta, *,
                     tile_bytes=2 * 1024 * 1024, out_dtype=jnp.bfloat16):
    """x: (N, Cin, H, W) NCHW.  weight: (Cin, Cout, 2, 2) (ConvTranspose2d layout).
    Returns (N, Cout, 2H, 2W) in `out_dtype`, matching Deconv2dBN.forward in
    training mode (batch statistics)."""
    N, Cin, H, W = x.shape
    Cin_w, Cout, kH, kW = weight.shape
    assert Cin == Cin_w and kH == 2 and kW == 2
    taps = kH * kW
    lanes_tap = taps * Cout
    M = N * H * W

    # ---- static layout / tiling choices -----------------------------------
    P = _pick_pack(lanes_tap, Cin)
    L = P * lanes_tap                       # output lanes per packed row
    K = P * Cin                             # contraction dim per packed row
    osize = jnp.dtype(out_dtype).itemsize

    Mp = _cdiv(M, P)                        # packed rows actually needed
    # tile sized by bytes (~tile_bytes of output per block), clamped so the
    # double-buffered x + out tiles stay under ~12 MiB (v5e 16 MiB scoped VMEM).
    rows_budget = max(8, (12 * 1024 * 1024) // (2 * (K * 2 + L * osize)))
    rows_target = max(8, tile_bytes // (L * osize))
    tmp = max(8, (min(rows_target, rows_budget) // 8) * 8)
    tmp = min(tmp, _round_up(Mp, 8))
    g = _cdiv(Mp, tmp)                      # grid steps
    tmp = _round_up(_cdiv(Mp, g), 8)        # rebalance so padding waste is tiny
    Mp_pad = g * tmp
    M_pad = Mp_pad * P
    grid = (g,)

    # ---- wrapper-side layout (fuses under jit; vanishes in an NHWC model) --
    x_flat = jnp.transpose(x, (0, 2, 3, 1)).reshape(M, Cin).astype(jnp.float32)
    # (Cin, Cout, kH, kW) -> (Cin, kH*kW*Cout): all 4 taps fused along lanes.
    w_cat = jnp.transpose(weight, (0, 2, 3, 1)).reshape(Cin, lanes_tap).astype(jnp.float32)

    # ---- BN batch statistics via centered Gram identities (exact f32, XLA) --
    #   y[m, t, c] = w[:, t, c] . x[m]   (conv bias dropped: cancels under BN)
    xbar = jnp.mean(x_flat, axis=0)                                   # (Cin,)
    xc = x_flat - xbar
    gram = jnp.einsum('mk,ml->kl', xc, xc, precision='highest')       # (Cin, Cin)
    a = jnp.einsum('k,kl->l', xbar, w_cat,
                   precision='highest').reshape(taps, Cout)           # per-tap mean of y
    quad = jnp.sum(w_cat * (gram @ w_cat), axis=0).reshape(taps, Cout)
    mean_c = jnp.mean(a, axis=0)                                      # (Cout,)
    # biased (train-mode) variance over all N*2H*2W positions; both terms >= 0.
    var_c = (jnp.sum(quad, axis=0)
             + M * (jnp.sum(a * a, axis=0) - taps * mean_c * mean_c)) / (taps * M)
    var_c = jnp.maximum(var_c, 0.0)
    scale_c = gamma.astype(jnp.float32) * jax.lax.rsqrt(var_c + _EPS)
    shift_c = beta.astype(jnp.float32) - mean_c * scale_c
    scale_l = jnp.tile(scale_c, P * taps).reshape(1, L)
    shift_l = jnp.tile(shift_c, P * taps).reshape(1, L)
    # NOTE: `bias` is intentionally unused in the forward — it cancels exactly
    # under training-mode BatchNorm (it would matter only for running-stat
    # updates / eval mode, which are not produced here).
    del bias

    # ---- pack pixels into lanes: (Mp_pad, P*Cin) bf16, zero-padded rows ----
    if M_pad != M:
        x_flat = jnp.concatenate(
            [x_flat, jnp.zeros((M_pad - M, Cin), x_flat.dtype)], axis=0)
    x_packed = x_flat.reshape(Mp_pad, K).astype(jnp.bfloat16)
    # Block-diagonal expansion so P packed pixels share one lane-dense matmul.
    w_big = jnp.kron(jnp.eye(P, dtype=jnp.float32), w_cat).astype(jnp.bfloat16)

    # ---- single Pallas pass: matmul + folded BN + ReLU, bf16 output -------
    out_flat = pl.pallas_call(
        _deconv_bn_relu_kernel,
        grid=grid,
        in_specs=[
            pl.BlockSpec((tmp, K), lambda i: (i, 0)),
            pl.BlockSpec((K, L), lambda i: (0, 0)),
            pl.BlockSpec((1, L), lambda i: (0, 0)),
            pl.BlockSpec((1, L), lambda i: (0, 0)),
        ],
        out_specs=pl.BlockSpec((tmp, L), lambda i: (i, 0)),
        out_shape=jax.ShapeDtypeStruct((Mp_pad, L), out_dtype),
        compiler_params=pltpu.CompilerParams(
            dimension_semantics=("parallel",)),   # megacore-shardable on v7x
    )(x_packed, w_big, scale_l, shift_l)

    # ---- scatter to NCHW (bf16; fuses with the consumer when kept under jit).
    # If the consumer accepts NHWC / (N,H,W,2,2,Cout), delete this transpose.
    y = out_flat.reshape(M_pad, lanes_tap)[:M]
    y = y.reshape(N, H, W, kH, kW, Cout)
    y = jnp.transpose(y, (0, 5, 1, 3, 2, 4))       # (N, Cout, H, ki, W, kj)
    return y.reshape(N, Cout, H * kH, W * kW)


def _reference(x, weight, bias, gamma, beta):
    """Pure-JAX f32 reference with the module's exact semantics (incl. bias)."""
    N, Cin, H, W = x.shape
    Cout = weight.shape[1]
    t = jnp.einsum('nchw,coij->nohiwj', x, weight, precision='highest')
    y = t.reshape(N, Cout, 2 * H, 2 * W) + bias[None, :, None, None]
    mean = jnp.mean(y, axis=(0, 2, 3), keepdims=True)
    var = jnp.mean((y - mean) ** 2, axis=(0, 2, 3), keepdims=True)
    yn = (y - mean) * jax.lax.rsqrt(var + _EPS)
    return jnp.maximum(yn * gamma[None, :, None, None] + beta[None, :, None, None], 0.0)


if __name__ == "__main__":
    def make_inputs(key, N, Cin, H, W, Cout):
        kx, kw, kb, kg, kbt = jax.random.split(key, 5)
        x = jax.random.normal(kx, (N, Cin, H, W), dtype=jnp.float32)
        weight = jax.random.normal(kw, (Cin, Cout, 2, 2), dtype=jnp.float32) * 0.2
        bias = jax.random.normal(kb, (Cout,), dtype=jnp.float32) * 0.1
        gamma = 1.0 + 0.1 * jax.random.normal(kg, (Cout,), dtype=jnp.float32)
        beta = 0.1 * jax.random.normal(kbt, (Cout,), dtype=jnp.float32)
        return x, weight, bias, gamma, beta

    def check(out, ref, shape):
        assert out.shape == shape, out.shape
        out32 = out.astype(jnp.float32)
        err = float(jnp.max(jnp.abs(out32 - ref)))
        # tolerance reflects bf16 MXU inputs + bf16 output vs f32 reference
        assert jnp.allclose(out32, ref, atol=3e-2, rtol=3e-2), err

    # tile_bytes=8192 forces a multi-step grid at these toy sizes so the
    # pipelined / tiled path is exercised; real shapes should keep the ~2 MiB
    # default (same block bytes on v5e / v6e / v7x).
    fwd = jax.jit(functools.partial(deconv2d_bn_relu, tile_bytes=8192))

    # primary case: N=2, Cin=4, H=W=16, Cout=8 (M divisible by the packing)
    N, Cin, H, W, Cout = 2, 4, 16, 16, 8
    x, weight, bias, gamma, beta = make_inputs(jax.random.PRNGKey(0), N, Cin, H, W, Cout)
    out = jax.block_until_ready(fwd(x, weight, bias, gamma, beta))
    ref = jax.block_until_ready(_reference(x, weight, bias, gamma, beta))
    check(out, ref, (N, Cout, 2 * H, 2 * W))

    # awkward-M case: H=W=15 exercises the zero-padding path (M=450 is not a
    # multiple of the pixel-packing factor P or of the tile row count).
    N, Cin, H, W, Cout = 2, 4, 15, 15, 8
    x, weight, bias, gamma, beta = make_inputs(jax.random.PRNGKey(1), N, Cin, H, W, Cout)
    out = jax.block_until_ready(fwd(x, weight, bias, gamma, beta))
    ref = jax.block_until_ready(_reference(x, weight, bias, gamma, beta))
    check(out, ref, (N, Cout, 2 * H, 2 * W))

    print("KERNEL_OK")
</pallas_src>

<mosaic_0001>
module attributes {stable_mosaic.version = 11 : i64} {
  func.func @_deconv_bn_relu_kernel(%arg0: i32, %arg1: memref<16x32xbf16, #tpu.memory_space<vmem>>, %arg2: memref<32x256xbf16, #tpu.memory_space<vmem>>, %arg3: memref<1x256xf32, #tpu.memory_space<vmem>>, %arg4: memref<1x256xf32, #tpu.memory_space<vmem>>, %arg5: memref<16x256xbf16, #tpu.memory_space<vmem>>) attributes {dimension_semantics = [#tpu.dimension_semantics<parallel>], iteration_bounds = array<i64: 4>, scalar_prefetch = 0 : i64, scratch_operands = 0 : i64, tpu.core_type = #tpu.core_type<tc>, window_params = [{transform_indices = @transform_0, window_bounds = array<i64: 16, 32>}, {pipeline_mode = #tpu.pipeline_mode<synchronous>, transform_indices = @transform_1, window_bounds = array<i64: 32, 256>}, {pipeline_mode = #tpu.pipeline_mode<synchronous>, transform_indices = @transform_2, window_bounds = array<i64: 1, 256>}, {pipeline_mode = #tpu.pipeline_mode<synchronous>, transform_indices = @transform_3, window_bounds = array<i64: 1, 256>}, {transform_indices = @transform_4, window_bounds = array<i64: 16, 256>}]} {
    %c0 = arith.constant 0 : index
    %c0_0 = arith.constant 0 : index
    %0 = vector.load %arg1[%c0, %c0_0] : memref<16x32xbf16, #tpu.memory_space<vmem>>, vector<16x32xbf16>
    %c0_1 = arith.constant 0 : index
    %c0_2 = arith.constant 0 : index
    %1 = vector.load %arg2[%c0_1, %c0_2] : memref<32x256xbf16, #tpu.memory_space<vmem>>, vector<32x256xbf16>
    %cst = arith.constant dense<0.000000e+00> : vector<16x256xf32>
    %2 = tpu.matmul %0, %1, %cst {dimension_numbers = #tpu.dot_dimension_numbers<[1], [0], [0], [1], [0, 0, 1, 1], [], []>} : vector<16x32xbf16>, vector<32x256xbf16>, vector<16x256xf32> -> vector<16x256xf32>
    %c0_3 = arith.constant 0 : index
    %c0_4 = arith.constant 0 : index
    %3 = vector.load %arg3[%c0_3, %c0_4] : memref<1x256xf32, #tpu.memory_space<vmem>>, vector<1x256xf32>
    %4 = vector.broadcast %3 : vector<1x256xf32> to vector<16x256xf32>
    %5 = arith.mulf %2, %4 : vector<16x256xf32>
    %c0_5 = arith.constant 0 : index
    %c0_6 = arith.constant 0 : index
    %6 = vector.load %arg4[%c0_5, %c0_6] : memref<1x256xf32, #tpu.memory_space<vmem>>, vector<1x256xf32>
    %7 = vector.broadcast %6 : vector<1x256xf32> to vector<16x256xf32>
    %8 = arith.addf %5, %7 : vector<16x256xf32>
    %cst_7 = arith.constant 0.000000e+00 : f32
    %9 = vector.broadcast %cst_7 : f32 to vector<16x256xf32>
    %10 = arith.maximumf %8, %9 : vector<16x256xf32>
    %11 = arith.truncf %10 : vector<16x256xf32> to vector<16x256xbf16>
    %c0_8 = arith.constant 0 : index
    %c0_9 = arith.constant 0 : index
    %12 = vector.load %arg5[%c0_8, %c0_9] : memref<16x256xbf16, #tpu.memory_space<vmem>>, vector<16x256xbf16>
    tpu.vector_store %arg5[%c0_8, %c0_9], %11 {strides = array<i32>} : memref<16x256xbf16, #tpu.memory_space<vmem>>, vector<16x256xbf16>,
    return
  }
  func.func @transform_0(%arg0: i32) -> (i32, i32) {
    %c0_i32 = arith.constant 0 : i32
    %c0_i32_0 = arith.constant 0 : i32
    return %arg0, %c0_i32 : i32, i32
  }
  func.func @transform_1(%arg0: i32) -> (i32, i32) {
    %c0_i32 = arith.constant 0 : i32
    %c0_i32_0 = arith.constant 0 : i32
    %c0_i32_1 = arith.constant 0 : i32
    return %c0_i32, %c0_i32_0 : i32, i32
  }
  func.func @transform_2(%arg0: i32) -> (i32, i32) {
    %c0_i32 = arith.constant 0 : i32
    %c0_i32_0 = arith.constant 0 : i32
    %c0_i32_1 = arith.constant 0 : i32
    return %c0_i32, %c0_i32_0 : i32, i32
  }
  func.func @transform_3(%arg0: i32) -> (i32, i32) {
    %c0_i32 = arith.constant 0 : i32
    %c0_i32_0 = arith.constant 0 : i32
    %c0_i32_1 = arith.constant 0 : i32
    return %c0_i32, %c0_i32_0 : i32, i32
  }
  func.func @transform_4(%arg0: i32) -> (i32, i32) {
    %c0_i32 = arith.constant 0 : i32
    %c0_i32_0 = arith.constant 0 : i32
    return %arg0, %c0_i32 : i32, i32
  }
}

</mosaic_0001>

<llo_original>
// kernel: mul.4
$region0: #{mul.4}
  %s0 = inlined_call_operand.vmem [shape: f32[4,2,2,8], index: 0, kind: input, shape index: {}]
  %s1 = inlined_call_operand.vmem [shape: f32[4,32], index: 1, kind: output, shape index: {}]
  $region1: #{mul.4} parent=0
    #allocation0 [shape = 'u8[4096]{0}', space=vmem, size = 0x1000, scoped, tag = 'scoped mem for output reshape']
    #allocation1 [shape = 'u8[32768]{0}', space=vmem, size = 0x8000, scoped, tag = 'scoped mem for input reshape']
    %s3 = sshll.u32 1, 2
    %s4 = ssub.s32 %s3, 1
    %s5 = smul.addr 2, 7
    %s6 = scalar_lea.vmem %s0, %s5
    %v7 = vld [vmem:[%s6] sm:%s4]
    %s8 = scalar_lea.vmem [#allocation1], 56
    %9 = vst [vmem:[%s8] sm:%s4] %v7
    %s10 = smul.addr 2, 6
    %s11 = scalar_lea.vmem %s0, %s10
    %v12 = vld [vmem:[%s11] sm:%s4]
    %s13 = scalar_lea.vmem [#allocation1], 48
    %14 = vst [vmem:[%s13] sm:%s4] %v12
    %s15 = smul.addr 2, 5
    %s16 = scalar_lea.vmem %s0, %s15
    %v17 = vld [vmem:[%s16] sm:%s4]
    %s18 = scalar_lea.vmem [#allocation1], 40
    %19 = vst [vmem:[%s18] sm:%s4] %v17
    %s20 = smul.addr 2, 4
    %s21 = scalar_lea.vmem %s0, %s20
    %v22 = vld [vmem:[%s21] sm:%s4]
    %s23 = scalar_lea.vmem [#allocation1], 32
    %24 = vst [vmem:[%s23] sm:%s4] %v22
    %s25 = smul.addr 2, 3
    %s26 = scalar_lea.vmem %s0, %s25
    %v27 = vld [vmem:[%s26] sm:%s4]
    %s28 = scalar_lea.vmem [#allocation1], 24
    %29 = vst [vmem:[%s28] sm:%s4] %v27
    %s30 = smul.addr 2, 2
    %s31 = scalar_lea.vmem %s0, %s30
    %v32 = vld [vmem:[%s31] sm:%s4]
    %s33 = scalar_lea.vmem [#allocation1], 16
    %34 = vst [vmem:[%s33] sm:%s4] %v32
    %s35 = scalar_lea.vmem %s0, 2
    %v36 = vld [vmem:[%s35] sm:%s4]
    %s37 = scalar_lea.vmem [#allocation1], 8
    %38 = vst [vmem:[%s37] sm:%s4] %v36
    %v39 = vld [vmem:[%s0] sm:%s4]
    %40 = vst [vmem:[#allocation1] sm:%s4] %v39
    %s41 = smov 3
    %v42 = vld [vmem:[#allocation1] ss:$16 sm:%s41]
    %s43 = smov 12
    %v44 = vld [vmem:[#allocation1] ss:$16 sm:%s43]
    %vm45 = vcmask 1043458
    %v46 = vsel %vm45, %v44, %v42
    %vm47 = vcmask 64512
    %48 = vst.msk [vmem:[#allocation0] sm:$0xf] %vm47, %v46
    %s49 = scalar_lea.vmem [#allocation1], 9
    %s50 = smov 3
    %v51 = vld [vmem:[%s49] ss:$16 sm:%s50]
    %s52 = scalar_lea.vmem [#allocation1], 9
    %s53 = smov 12
    %v54 = vld [vmem:[%s52] ss:$16 sm:%s53]
    %vm55 = vcmask 1043458
    %v56 = vsel %vm55, %v54, %v51
    %57 = vrot.lane.b32.xlu0 %v56, 24
    %v58 = vpop.permute.xlu0 %57
    %vm59 = vcmask 261312
    %60 = vst.msk [vmem:[#allocation0] sm:$0xf] %vm59, %v58
    %s61 = scalar_lea.vmem [#allocation1], 8
    %s62 = smov 3
    %v63 = vld [vmem:[%s61] ss:$16 sm:%s62]
    %s64 = scalar_lea.vmem [#allocation1], 8
    %s65 = smov 12
    %v66 = vld [vmem:[%s64] ss:$16 sm:%s65]
    %vm67 = vcmask 1043458
    %v68 = vsel %vm67, %v66, %v63
    %69 = vrot.lane.b32.xlu0 %v68, 16
    %v70 = vpop.permute.xlu0 %69
    %vm71 = vcmask 195712
    %72 = vst.msk [vmem:[#allocation0] sm:$0xf] %vm71, %v70
    %s73 = scalar_lea.vmem [#allocation1], 1
    %s74 = smov 3
    %v75 = vld [vmem:[%s73] ss:$16 sm:%s74]
    %s76 = scalar_lea.vmem [#allocation1], 1
    %s77 = smov 12
    %v78 = vld [vmem:[%s76] ss:$16 sm:%s77]
    %vm79 = vcmask 1043458
    %v80 = vsel %vm79, %v78, %v75
    %81 = vrot.lane.b32.xlu0 %v80, 8
    %v82 = vpop.permute.xlu0 %81
    %vm83 = vcmask 130112
    %84 = vst.msk [vmem:[#allocation0] sm:$0xf] %vm83, %v82
    %s86 = sshll.u32 1, 4
    %s87 = ssub.s32 %s86, 1
    %v89 = vld [vmem:[#allocation0] sm:%s87]
    %s90 = sshll.u32 1, 4
    %s91 = ssub.s32 %s90, 1
    %92 = vst [vmem:[%s1] sm:%s91] %v89

// kernel: tile.18
$region0: #{tile.18}
  #allocation0 [shape = 's32[1]{0}', space=sflag, size = 0x4, scoped, tag = 'scoped memory for tile.18']
  %s0 = inlined_call_operand.vmem [shape: f32[8], index: 0, kind: input, shape index: {}]
  %s1 = inlined_call_operand.vmem [shape: f32[32,8], index: 1, kind: output, shape index: {}]
  // Predicated region
  $region2: #{tile.18} parent=0 // pred_check
    _
  $region3: #{tile.18} parent=0 // pred_check_branch
    %3 = sbr.rel (0) target = $region5
  $region4: #{tile.18} parent=0 // pred_region
    _
  $region5: #{tile.18} parent=0 // pred_fallthru
    _
  %v4 = vld [vmem:[%s0] ss:$0 sm:$0xff]
  %5 = vst [vmem:[%s1] sm:$0xff] %v4
  %s6 = scalar_lea.vmem %s1, 8
  %7 = vst [vmem:[%s6] sm:$0xff] %v4
  %s8 = scalar_lea.vmem %s1, 16
  %9 = vst [vmem:[%s8] sm:$0xff] %v4
  %s10 = scalar_lea.vmem %s1, 24
  %11 = vst [vmem:[%s10] sm:$0xff] %v4

// kernel: tile.19
$region0: #{tile.19}
  %s0 = inlined_call_operand.vmem [shape: f32[32,8], index: 0, kind: input, shape index: {}]
  %s1 = inlined_call_operand.vmem [shape: f32[1,256], index: 1, kind: output, shape index: {}]
  $region1: #{tile.19} parent=0
    #allocation0 [shape = 'u8[8192]{0}', space=vmem, size = 0x2000, scoped, tag = 'scoped mem for output reshape']
    %s2 = smov 3
    %v3 = vld [vmem:[%s0] ss:$16 sm:%s2]
    %vm4 = vcmask 64512
    %5 = vst.msk [vmem:[#allocation0] ss:$8 sm:$0x3] %vm4, %v3
    %s6 = scalar_lea.vmem %s0, 15
    %s7 = smov 3
    %v8 = vld [vmem:[%s6] ss:$16 sm:%s7]
    %9 = vrot.lane.b32.xlu0 %v8, 120
    %v10 = vpop.permute.xlu0 %9
    %vm11 = vcmask 1048512
    %12 = vst.msk [vmem:[#allocation0] ss:$8 sm:$0x3] %vm11, %v10
    %s13 = scalar_lea.vmem %s0, 14
    %s14 = smov 3
    %v15 = vld [vmem:[%s13] ss:$16 sm:%s14]
    %16 = vrot.lane.b32.xlu0 %v15, 112
    %v17 = vpop.permute.xlu0 %16
    %vm18 = vcmask 982912
    %19 = vst.msk [vmem:[#allocation0] ss:$8 sm:$0x3] %vm18, %v17
    %s20 = scalar_lea.vmem %s0, 13
    %s21 = smov 3
    %v22 = vld [vmem:[%s20] ss:$16 sm:%s21]
    %23 = vrot.lane.b32.xlu0 %v22, 104
    %v24 = vpop.permute.xlu0 %23
    %vm25 = vcmask 917312
    %26 = vst.msk [vmem:[#allocation0] ss:$8 sm:$0x3] %vm25, %v24
    %s27 = scalar_lea.vmem %s0, 12
    %s28 = smov 3
    %v29 = vld [vmem:[%s27] ss:$16 sm:%s28]
    %30 = vrot.lane.b32.xlu0 %v29, 96
    %v31 = vpop.permute.xlu0 %30
    %vm32 = vcmask 851712
    %33 = vst.msk [vmem:[#allocation0] ss:$8 sm:$0x3] %vm32, %v31
    %s34 = scalar_lea.vmem %s0, 11
    %s35 = smov 3
    %v36 = vld [vmem:[%s34] ss:$16 sm:%s35]
    %37 = vrot.lane.b32.xlu0 %v36, 88
    %v38 = vpop.permute.xlu0 %37
    %vm39 = vcmask 786112
    %40 = vst.msk [vmem:[#allocation0] ss:$8 sm:$0x3] %vm39, %v38
    %s41 = scalar_lea.vmem %s0, 10
    %s42 = smov 3
    %v43 = vld [vmem:[%s41] ss:$16 sm:%s42]
    %44 = vrot.lane.b32.xlu0 %v43, 80
    %v45 = vpop.permute.xlu0 %44
    %vm46 = vcmask 720512
    %47 = vst.msk [vmem:[#allocation0] ss:$8 sm:$0x3] %vm46, %v45
    %s48 = scalar_lea.vmem %s0, 9
    %s49 = smov 3
    %v50 = vld [vmem:[%s48] ss:$16 sm:%s49]
    %51 = vrot.lane.b32.xlu0 %v50, 72
    %v52 = vpop.permute.xlu0 %51
    %vm53 = vcmask 654912
    %54 = vst.msk [vmem:[#allocation0] ss:$8 sm:$0x3] %vm53, %v52
    %s55 = scalar_lea.vmem %s0, 8
    %s56 = smov 3
    %v57 = vld [vmem:[%s55] ss:$16 sm:%s56]
    %58 = vrot.lane.b32.xlu0 %v57, 64
    %v59 = vpop.permute.xlu0 %58
    %vm60 = vcmask 589312
    %61 = vst.msk [vmem:[#allocation0] ss:$8 sm:$0x3] %vm60, %v59
    %s62 = scalar_lea.vmem %s0, 7
    %s63 = smov 3
    %v64 = vld [vmem:[%s62] ss:$16 sm:%s63]
    %65 = vrot.lane.b32.xlu0 %v64, 56
    %v66 = vpop.permute.xlu0 %65
    %vm67 = vcmask 523712
    %68 = vst.msk [vmem:[#allocation0] ss:$8 sm:$0x3] %vm67, %v66
    %s69 = scalar_lea.vmem %s0, 6
    %s70 = smov 3
    %v71 = vld [vmem:[%s69] ss:$16 sm:%s70]
    %72 = vrot.lane.b32.xlu0 %v71, 48
    %v73 = vpop.permute.xlu0 %72
    %vm74 = vcmask 458112
    %75 = vst.msk [vmem:[#allocation0] ss:$8 sm:$0x3] %vm74, %v73
    %s76 = scalar_lea.vmem %s0, 5
    %s77 = smov 3
    %v78 = vld [vmem:[%s76] ss:$16 sm:%s77]
    %79 = vrot.lane.b32.xlu0 %v78, 40
    %v80 = vpop.permute.xlu0 %79
    %vm81 = vcmask 392512
    %82 = vst.msk [vmem:[#allocation0] ss:$8 sm:$0x3] %vm81, %v80
    %s83 = scalar_lea.vmem %s0, 4
    %s84 = smov 3
    %v85 = vld [vmem:[%s83] ss:$16 sm:%s84]
    %86 = vrot.lane.b32.xlu0 %v85, 32
    %v87 = vpop.permute.xlu0 %86
    %vm88 = vcmask 326912
    %89 = vst.msk [vmem:[#allocation0] ss:$8 sm:$0x3] %vm88, %v87
    %s90 = scalar_lea.vmem %s0, 3
    %s91 = smov 3
    %v92 = vld [vmem:[%s90] ss:$16 sm:%s91]
    %93 = vrot.lane.b32.xlu0 %v92, 24
    %v94 = vpop.permute.xlu0 %93
    %vm95 = vcmask 261312
    %96 = vst.msk [vmem:[#allocation0] ss:$8 sm:$0x3] %vm95, %v94
    %s97 = scalar_lea.vmem %s0, 2
    %s98 = smov 3
    %v99 = vld [vmem:[%s97] ss:$16 sm:%s98]
    %100 = vrot.lane.b32.xlu0 %v99, 16
    %v101 = vpop.permute.xlu0 %100
    %vm102 = vcmask 195712
    %103 = vst.msk [vmem:[#allocation0] ss:$8 sm:$0x3] %vm102, %v101
    %s104 = scalar_lea.vmem %s0, 1
    %s105 = smov 3
    %v106 = vld [vmem:[%s104] ss:$16 sm:%s105]
    %107 = vrot.lane.b32.xlu0 %v106, 8
    %v108 = vpop.permute.xlu0 %107
    %vm109 = vcmask 130112
    %110 = vst.msk [vmem:[#allocation0] ss:$8 sm:$0x3] %vm109, %v108
    %s112 = sshll.u32 1, 1
    %s113 = ssub.s32 %s112, 1
    %v115 = vld [vmem:[#allocation0] sm:%s113]
    %s116 = sshll.u32 1, 1
    %s117 = ssub.s32 %s116, 1
    %118 = vst [vmem:[%s1] sm:%s117] %v115
    %s119 = scalar_lea.vmem [#allocation0], 8
    %v120 = vld [vmem:[%s119] sm:%s113]
    %s121 = sshll.u32 1, 1
    %s122 = ssub.s32 %s121, 1
    %s123 = scalar_lea.vmem %s1, 1
    %124 = vst [vmem:[%s123] sm:%s122] %v120

// kernel: deconv2d_bn_relu.1
$region0: #{deconv2d_bn_relu.1}
  #allocation0 [shape = 'u32[]', space=smem, size = 0x4, offset = 0x4, fixed_abs, tag = 'smem constant byte address 0x4 - core index']
  #allocation1 [shape = 'u32[144,128]{1,0:T(1,128)}', space=vmem, size = 0x12000, scoped, tag = 'internal scratch']
  %s0 = inlined_call_operand.vmem [shape: bf16[64,32], index: 0, kind: input, shape index: {}]
  %s1 = inlined_call_operand.vmem [shape: bf16[32,256], index: 1, kind: input, shape index: {}]
  %s2 = inlined_call_operand.vmem [shape: f32[1,256], index: 2, kind: input, shape index: {}]
  %s3 = inlined_call_operand.vmem [shape: f32[1,256], index: 3, kind: input, shape index: {}]
  %s4 = inlined_call_operand.vmem [shape: bf16[64,256], index: 4, kind: output, shape index: {}]
  %s5 = sld [smem:[#allocation0]]
  $region49: #{deconv2d_bn_relu.1} parent=0
    _
  %s7 = ssub.s32 1, %s5
  %s8 = scalar_select 0, %s7, %s5
  loop: start=0, step=1, limit=6
  $region2: #{deconv2d_bn_relu.1} parent=0 // loop_pre_header
    _
  $region3: #{deconv2d_bn_relu.1} parent=0 // loop_header
    %s10 = sphi 0, %s14
    %p11 = scmp.ge.s32.totalorder %s10, 6
    %s20 = sphi 0, %s22
    %s23 = sphi 0, %s20
    %s24 = sphi 0, %s23
    %s40 = sphi 0, %s24
    %s44 = sphi 0, %s44
    %s46 = sphi 0, %s44
    %s47 = sphi 0, %s46
    %s61 = sphi 0, %s47
    %s65 = sphi 0, %s65
    %s67 = sphi 0, %s65
    %s68 = sphi 0, %s67
    %s82 = sphi 0, %s68
    %s86 = sphi 0, %s86
    %s88 = sphi 0, %s86
    %s89 = sphi 0, %s88
    %s103 = sphi 0, %s89
    %s109 = sphi 0, %s111
    %s112 = sphi 0, %s109
    %s113 = sphi 0, %s112
    %s129 = sphi 0, %s113
  $region4: #{deconv2d_bn_relu.1} parent=0 // loop_header_branch
    %13 = sbr.rel (%p11) target = $region8
  $region5: #{deconv2d_bn_relu.1} parent=0 // loop_body
    %s15 = ssub.s32 %s10, 1
    %s16 = ssub.s32 %s10, 2
    %s17 = sadd.s32 %s10, 1
    %s18 = ssub.s32 %s10, %s17
    %p19 = scmp.eq.s32.totalorder %s18, 0
    %s21 = sadd.s32 %s20, 1
    %s22 = scalar_select %p19, %s20, %s21
    %p25 = pneg %p19
    %p26 = scmp.eq.s32.totalorder %s10, 3
    %p27 = por %p25, %p26
    %p28 = scmp.ne.s32.totalorder %s20, %s23
    %p29 = scmp.eq.s32.totalorder %s10, 0
    %p30 = por %p28, %p29
    %p31 = scmp.ne.s32.totalorder %s20, %s23
    %p32 = scmp.eq.s32.totalorder %s15, 3
    %p33 = por %p31, %p32
    %p34 = scmp.ne.s32.totalorder %s23, %s24
    %p35 = scmp.eq.s32.totalorder %s15, 0
    %p36 = por %p34, %p35
    %p37 = scmp.ne.s32.totalorder %s23, %s24
    %p38 = scmp.eq.s32.totalorder %s16, 3
    %p39 = por %p37, %p38
    %p41 = scmp.ne.s32.totalorder %s24, %s40
    %p42 = scmp.eq.s32.totalorder %s16, 0
    %p43 = por %p41, %p42
    %s45 = sadd.s32 %s44, 1
    %p48 = scmp.eq.s32.totalorder %s10, 3
    %p49 = scmp.ne.s32.totalorder %s44, %s46
    %p50 = scmp.eq.s32.totalorder %s10, 0
    %p51 = por %p49, %p50
    %p52 = scmp.ne.s32.totalorder %s44, %s46
    %p53 = scmp.eq.s32.totalorder %s15, 3
    %p54 = por %p52, %p53
    %p55 = scmp.ne.s32.totalorder %s46, %s47
    %p56 = scmp.eq.s32.totalorder %s15, 0
    %p57 = por %p55, %p56
    %p58 = scmp.ne.s32.totalorder %s46, %s47
    %p59 = scmp.eq.s32.totalorder %s16, 3
    %p60 = por %p58, %p59
    %p62 = scmp.ne.s32.totalorder %s47, %s61
    %p63 = scmp.eq.s32.totalorder %s16, 0
    %p64 = por %p62, %p63
    %s66 = sadd.s32 %s65, 1
    %p69 = scmp.eq.s32.totalorder %s10, 3
    %p70 = scmp.ne.s32.totalorder %s65, %s67
    %p71 = scmp.eq.s32.totalorder %s10, 0
    %p72 = por %p70, %p71
    %p73 = scmp.ne.s32.totalorder %s65, %s67
    %p74 = scmp.eq.s32.totalorder %s15, 3
    %p75 = por %p73, %p74
    %p76 = scmp.ne.s32.totalorder %s67, %s68
    %p77 = scmp.eq.s32.totalorder %s15, 0
    %p78 = por %p76, %p77
    %p79 = scmp.ne.s32.totalorder %s67, %s68
    %p80 = scmp.eq.s32.totalorder %s16, 3
    %p81 = por %p79, %p80
    %p83 = scmp.ne.s32.totalorder %s68, %s82
    %p84 = scmp.eq.s32.totalorder %s16, 0
    %p85 = por %p83, %p84
    %s87 = sadd.s32 %s86, 1
    %p90 = scmp.eq.s32.totalorder %s10, 3
    %p91 = scmp.ne.s32.totalorder %s86, %s88
    %p92 = scmp.eq.s32.totalorder %s10, 0
    %p93 = por %p91, %p92
    %p94 = scmp.ne.s32.totalorder %s86, %s88
    %p95 = scmp.eq.s32.totalorder %s15, 3
    %p96 = por %p94, %p95
    %p97 = scmp.ne.s32.totalorder %s88, %s89
    %p98 = scmp.eq.s32.totalorder %s15, 0
    %p99 = por %p97, %p98
    %p100 = scmp.ne.s32.totalorder %s88, %s89
    %p101 = scmp.eq.s32.totalorder %s16, 3
    %p102 = por %p100, %p101
    %p104 = scmp.ne.s32.totalorder %s89, %s103
    %p105 = scmp.eq.s32.totalorder %s16, 0
    %p106 = por %p104, %p105
    %s107 = ssub.s32 %s10, %s17
    %p108 = scmp.eq.s32.totalorder %s107, 0
    %s110 = sadd.s32 %s109, 1
    %s111 = scalar_select %p108, %s109, %s110
    %p114 = pneg %p108
    %p115 = scmp.eq.s32.totalorder %s10, 3
    %p116 = por %p114, %p115
    %p117 = scmp.ne.s32.totalorder %s109, %s112
    %p118 = scmp.eq.s32.totalorder %s10, 0
    %p119 = por %p117, %p118
    %p120 = scmp.ne.s32.totalorder %s109, %s112
    %p121 = scmp.eq.s32.totalorder %s15, 3
    %p122 = por %p120, %p121
    %p123 = scmp.ne.s32.totalorder %s112, %s113
    %p124 = scmp.eq.s32.totalorder %s15, 0
    %p125 = por %p123, %p124
    %p126 = scmp.ne.s32.totalorder %s112, %s113
    %p127 = scmp.eq.s32.totalorder %s16, 3
    %p128 = por %p126, %p127
    %p130 = scmp.ne.s32.totalorder %s113, %s129
    %p131 = scmp.eq.s32.totalorder %s16, 0
    %p132 = por %p130, %p131
    %p133 = scmp.le.s32.totalorder 1, %s10
    %p134 = scmp.lt.s32.totalorder %s10, 5
    %p135 = pnand %p133, %p134
    %p136 = pneg %p135
    // Predicated region
    $region9: #{deconv2d_bn_relu.1} parent=5 // pred_check
      _
    $region10: #{deconv2d_bn_relu.1} parent=5 // pred_check_branch
      %138 = sbr.rel (%p135) target = $region12
    $region11: #{deconv2d_bn_relu.1} parent=5 // pred_region
      %s139 = ssub.s32 %s10, 1
      // Predicated region
      $region13: #{deconv2d_bn_relu.1} parent=11 // pred_check
        %p140 = pneg %p57
      $region14: #{deconv2d_bn_relu.1} parent=11 // pred_check_branch
        %142 = sbr.rel (%p140) target = $region16
      $region15: #{deconv2d_bn_relu.1} parent=11 // pred_region
        _
      $region16: #{deconv2d_bn_relu.1} parent=11 // pred_fallthru
        _
      // Predicated region
      $region17: #{deconv2d_bn_relu.1} parent=11 // pred_check
        %p143 = pneg %p78
      $region18: #{deconv2d_bn_relu.1} parent=11 // pred_check_branch
        %145 = sbr.rel (%p143) target = $region20
      $region19: #{deconv2d_bn_relu.1} parent=11 // pred_region
        _
      $region20: #{deconv2d_bn_relu.1} parent=11 // pred_fallthru
        _
      // Predicated region
      $region21: #{deconv2d_bn_relu.1} parent=11 // pred_check
        %p146 = pneg %p99
      $region22: #{deconv2d_bn_relu.1} parent=11 // pred_check_branch
        %148 = sbr.rel (%p146) target = $region24
      $region23: #{deconv2d_bn_relu.1} parent=11 // pred_region
        _
      $region24: #{deconv2d_bn_relu.1} parent=11 // pred_fallthru
        _
    $region12: #{deconv2d_bn_relu.1} parent=5 // pred_fallthru
      _
    %p149 = scmp.lt.s32.totalorder %s10, 4
    // Predicated region
    $region25: #{deconv2d_bn_relu.1} parent=5 // pred_check
      %p150 = pneg %p149
    $region26: #{deconv2d_bn_relu.1} parent=5 // pred_check_branch
      %152 = sbr.rel (%p150) target = $region28
    $region27: #{deconv2d_bn_relu.1} parent=5 // pred_region
      // Predicated region
      $region29: #{deconv2d_bn_relu.1} parent=27 // pred_check
        %p153 = pneg %p30
      $region30: #{deconv2d_bn_relu.1} parent=27 // pred_check_branch
        %155 = sbr.rel (%p153) target = $region32
      $region31: #{deconv2d_bn_relu.1} parent=27 // pred_region
        %s156 = smul.u32 2, %s10
        %p157 = scmp.lt.s32.totalorder %s156, 7
        %s158 = scalar_select %p157, %s156, 7
        %s159 = smul.addr %s158, 4
        %s160 = scalar_lea.vmem %s0, %s159
        %s161 = smul.u32 2, %s10
      $region32: #{deconv2d_bn_relu.1} parent=27 // pred_fallthru
        _
    $region28: #{deconv2d_bn_relu.1} parent=5 // pred_fallthru
      _
    %p162 = scmp.le.s32.totalorder 1, %s10
    %p163 = scmp.lt.s32.totalorder %s10, 5
    %p164 = pnand %p162, %p163
    %p165 = pneg %p164
    // Predicated region
    $region33: #{deconv2d_bn_relu.1} parent=5 // pred_check
      _
    $region34: #{deconv2d_bn_relu.1} parent=5 // pred_check_branch
      %167 = sbr.rel (%p164) target = $region36
    $region35: #{deconv2d_bn_relu.1} parent=5 // pred_region
      %s168 = ssub.s32 %s10, 1
      %s169 = smul.u32 2, %s15
      %p170 = scmp.lt.s32.totalorder %s169, 7
      %s171 = scalar_select %p170, %s169, 7
      %s172 = smul.addr %s171, 4
      %s173 = scalar_lea.vmem %s0, %s172
      %p174 = pneg %p36
      %p175 = pneg %p33
      %p176 = pneg %p57
      %p177 = pneg %p54
      %p178 = pneg %p78
      %p179 = pneg %p75
      %p180 = pneg %p99
      %p181 = pneg %p96
      %p182 = pneg %p125
      %p183 = pneg %p122
      %s184 = smul.u32 2, %s15
      %p185 = scmp.lt.s32.totalorder %s184, 7
      %s186 = scalar_select %p185, %s184, 7
      %s187 = smul.addr %s186, 2
      %s188 = smul.addr %s187, 4
      %s189 = scalar_lea.vmem %s4, %s188
      %s190 = smul.u32 2, %s15
      %p191 = scmp.lt.s32.totalorder %s190, 7
      %s192 = scalar_select %p191, %s190, 7
      %s193 = smul.addr %s192, 4
      %s194 = scalar_lea.vmem %s0, %s193
      %s195 = smul.u32 2, %s15
      %s196 = smul.u32 2, %s15
      %p197 = scmp.lt.s32.totalorder %s196, 7
      %s198 = scalar_select %p197, %s196, 7
      %s199 = smul.addr %s198, 2
      %s200 = smul.addr %s199, 4
      %s201 = scalar_lea.vmem %s4, %s200
      %s202 = smul.u32 2, %s15
      %v204 = vld [vmem:[%s194] sm:$0xf]
      %v205 = vld [vmem:[%s194 + $0x4] sm:$0xf]
      %v206 = vld [vmem:[%s1] sm:$0xff]
      %v207 = vld [vmem:[%s1 + $0x8] sm:$0xff]
      %v208 = vld [vmem:[%s1 + $0x10] sm:$0xff]
      %v209 = vld [vmem:[%s1 + $0x18] sm:$0xff]
      %v212 = vunpack.c.l.b16 %v204
      %v213 = vunpack.c.l.b16 %v205
      %v214 = vpack.c.b16 %v213, %v212
      %v219 = vunpack.c.l.b16 %v206
      %v220 = vunpack.c.h.b16 %v206
      %v221 = vunpack.c.l.b16 %v207
      %v222 = vunpack.c.h.b16 %v207
      %v223 = vunpack.c.l.b16 %v208
      %v224 = vunpack.c.h.b16 %v208
      %v225 = vunpack.c.l.b16 %v209
      %v226 = vunpack.c.h.b16 %v209
      %v227 = vpack.c.b16 %v221, %v219
      %v228 = vpack.c.b16 %v222, %v220
      %v229 = vpack.c.b16 %v225, %v223
      %v230 = vpack.c.b16 %v226, %v224
      %vm235 = vcmask 261120
      %v237 = vsel %vm235, %v214, 0
      %239 = vmatprep.subr.bf16.mxu0 0
      %240 = vmatpush1.bf16.msra.mxu0 0
      %241 = vmatprep.subr.bf16.mxu0 0
      %242 = vmatpush1.bf16.msra.mxu0 0
      %243 = vmatprep.subr.bf16.mxu0 0
      %244 = vmatpush1.bf16.msra.mxu0 0
      %245 = vmatprep.subr.bf16.mxu0 0
      %246 = vmatpush1.bf16.msra.mxu0 0
      %247 = vmatprep.subr.bf16.mxu0 0
      %248 = vmatpush1.bf16.msra.mxu0 0
      %249 = vmatprep.subr.bf16.mxu0 0
      %250 = vmatpush1.bf16.msra.mxu0 0
      %251 = vmatprep.subr.bf16.mxu0 %v230
      %252 = vmatpush1.bf16.msra.mxu0 %v229
      %253 = vmatprep.subr.bf16.mxu0 %v228
      %254 = vmatpush1.bf16.msra.mxu0 %v227
      %255 = vmatprep.subr.bf16.mxu0 0
      %256 = vmatpush2.bf16.msra.mxu0 0
      %257 = vmatprep.subr.bf16.mxu0 0
      %258 = vmatpush2.bf16.msra.mxu0 0
      %259 = vmatprep.subr.bf16.mxu0 0
      %260 = vmatpush2.bf16.msra.mxu0 0
      %261 = vmatprep.subr.bf16.mxu0 0
      %262 = vmatpush2.bf16.msra.mxu0 0
      %263 = vmatprep.subr.bf16.mxu0 0
      %264 = vmatpush2.bf16.msra.mxu0 0
      %265 = vmatprep.subr.bf16.mxu0 0
      %266 = vmatpush2.bf16.msra.mxu0 0
      %267 = vmatprep.subr.bf16.mxu0 0
      %268 = vmatpush2.bf16.msra.mxu0 0
      %269 = vmatprep.subr.bf16.mxu0 0
      %270 = vmatpush2.bf16.msra.mxu0 0
      %271 = vmatprep.mubr.bf16.mxu0 0
      %272 = vmatmul.mubr.bf16.gmra.mxu0 %v237
      %v273 = vpop.f32.mrf.mxu0
      %v274 = vadd.f32 0.0, %v273
      %v275 = vpop.f32.mrf.mxu0
      %v276 = vadd.f32 0.0, %v275
      %v277 = vpop.f32.mrf.mxu0
      %v278 = vadd.f32 0.0, %v277
      %v279 = vpop.f32.mrf.mxu0
      %v280 = vadd.f32 0.0, %v279
      %281 = vdwg.mxu0
      %v282 = vld [vmem:[%s2] sm:$0x3]
      %v284 = vlaneseq
      %v285 = vshrl.u32 %v284, 7
      %v286 = vsub.s32 0, %v285
      %v287 = vrot.slane %v282, %v286
      %v288 = vlaneseq
      %v289 = vshrl.u32 %v288, 7
      %v290 = vsub.s32 1, %v289
      %v291 = vrot.slane %v282, %v290
      %v294 = vmul.f32 %v274, %v287
      %v295 = vmul.f32 %v276, %v291
      %v296 = vmul.f32 %v278, %v287
      %v297 = vmul.f32 %v280, %v291
      %v298 = vld [vmem:[%s3] sm:$0x3]
      %v300 = vlaneseq
      %v301 = vshrl.u32 %v300, 7
      %v302 = vsub.s32 0, %v301
      %v303 = vrot.slane %v298, %v302
      %v304 = vlaneseq
      %v305 = vshrl.u32 %v304, 7
      %v306 = vsub.s32 1, %v305
      %v307 = vrot.slane %v298, %v306
      %v310 = vadd.f32 %v294, %v303
      %v311 = vadd.f32 %v295, %v307
      %v312 = vadd.f32 %v296, %v303
      %v313 = vadd.f32 %v297, %v307
      %v314 = vmax.f32 %v310, 0.0
      %v315 = vmax.f32 %v311, 0.0
      %v316 = vmax.f32 %v312, 0.0
      %v317 = vmax.f32 %v313, 0.0
      %v318 = vpack.c.bf16 %v316, %v314
      %v319 = vpack.c.bf16 %v317, %v315
      %v322 = vunpack.c.l.b16 %v318
      %v323 = vunpack.c.l.b16 %v319
      %v324 = vunpack.c.h.b16 %v318
      %v325 = vunpack.c.h.b16 %v319
      %v326 = vpack.c.b16 %v323, %v322
      %v327 = vpack.c.b16 %v325, %v324
      %330 = vst [vmem:[%s201] sm:$0xff] %v326
      %331 = vst [vmem:[%s201 + $0x8] sm:$0xff] %v327
      %s332 = smul.u32 2, %s15
      %p333 = scmp.lt.s32.totalorder %s332, 7
      %s334 = scalar_select %p333, %s332, 7
      %s335 = smul.addr %s334, 2
      %s336 = smul.addr %s335, 4
      %s337 = scalar_lea.vmem %s4, %s336
      // Predicated region
      $region37: #{deconv2d_bn_relu.1} parent=35 // pred_check
        %p338 = pneg %p122
      $region38: #{deconv2d_bn_relu.1} parent=35 // pred_check_branch
        %340 = sbr.rel (%p338) target = $region40
      $region39: #{deconv2d_bn_relu.1} parent=35 // pred_region
        %s341 = smul.u32 2, %s15
      $region40: #{deconv2d_bn_relu.1} parent=35 // pred_fallthru
        _
    $region36: #{deconv2d_bn_relu.1} parent=5 // pred_fallthru
      _
    %p342 = scmp.le.s32.totalorder 2, %s10
    // Predicated region
    $region41: #{deconv2d_bn_relu.1} parent=5 // pred_check
      %p343 = pneg %p342
    $region42: #{deconv2d_bn_relu.1} parent=5 // pred_check_branch
      %345 = sbr.rel (%p343) target = $region44
    $region43: #{deconv2d_bn_relu.1} parent=5 // pred_region
      %s346 = ssub.s32 %s10, 2
      // Predicated region
      $region45: #{deconv2d_bn_relu.1} parent=43 // pred_check
        %p347 = pneg %p128
      $region46: #{deconv2d_bn_relu.1} parent=43 // pred_check_branch
        %349 = sbr.rel (%p347) target = $region48
      $region47: #{deconv2d_bn_relu.1} parent=43 // pred_region
        %s350 = smul.u32 2, %s16
        %p351 = scmp.lt.s32.totalorder %s350, 7
        %s352 = scalar_select %p351, %s350, 7
        %s353 = smul.addr %s352, 2
        %s354 = smul.addr %s353, 4
        %s355 = scalar_lea.vmem %s4, %s354
      $region48: #{deconv2d_bn_relu.1} parent=43 // pred_fallthru
        _
    $region44: #{deconv2d_bn_relu.1} parent=5 // pred_fallthru
      _
  $region6: #{deconv2d_bn_relu.1} parent=0 // loop_footer
    %s14 = sadd.s32 1, %s10
  $region7: #{deconv2d_bn_relu.1} parent=0 // loop_footer_branch
    %9 = sbr.rel target = $region3
  $region8: #{deconv2d_bn_relu.1} parent=0 // loop_exit
    _

</llo_original>
